<compile_context>
chip_gen: v7x
topology: tpu7x:2x2x1
jax: 0.10.0
libtpu: 0.0.40
codegen_flags: <defaults>
</compile_context>

<pallas_src>
import math
from functools import partial

import jax
import jax.numpy as jnp
from jax import lax
from jax.experimental import pallas as pl
from jax.experimental.pallas import tpu as pltpu

LANES = 128        # channel padding target (one vreg of lanes)
NEG = -1e30        # stands in for -inf in the max-pool padding


def _round_up(x, m):
    return (x + m - 1) // m * m


def _geom(H, W):
    """Per-image flattened zero-padded geometry: (H, W, Wp, Np, ghost G)."""
    Wp = W + 2
    Np = (H + 2) * Wp
    G = _round_up(Wp + 1, 8)
    return (H, W, Wp, Np, G)


def _tap_offsets(Wp):
    return [(dy - 1) * Wp + (dx - 1) for dy in range(3) for dx in range(3)]


# ----------------------------------------------------------------------------
# Eager hardware probes (cached).  Must be primed OUTSIDE jit (main() does it);
# jax.ensure_compile_time_eval makes them safe even if first hit under a trace.
# ----------------------------------------------------------------------------

_TPU_FEATURES = None


def _probe_tpu_features():
    """Returns (roll_matches_jnp, strided_pick_ok) as concrete Python bools."""
    global _TPU_FEATURES
    if _TPU_FEATURES is not None:
        return _TPU_FEATURES

    with jax.ensure_compile_time_eval():
        def roll_probe(x_ref, o_ref):
            o_ref[...] = pltpu.roll(x_ref[...], 1, axis=1)

        x = jnp.tile(jnp.arange(LANES, dtype=jnp.float32)[None, :], (8, 1))
        out = pl.pallas_call(
            roll_probe,
            out_shape=jax.ShapeDtypeStruct((8, LANES), jnp.float32))(x)
        v = float(out[0, 0])
        assert v in (1.0, float(LANES - 1)), f"unexpected pltpu.roll: {v}"
        roll_like_jnp = (v == float(LANES - 1))

        def stride_probe(x_ref, o_ref):
            o_ref[...] = x_ref[pl.ds(1, 4, stride=2), :]

        try:
            y = jnp.arange(16 * LANES, dtype=jnp.float32).reshape(16, LANES)
            picked = pl.pallas_call(
                stride_probe,
                out_shape=jax.ShapeDtypeStruct((4, LANES), jnp.float32))(y)
            strided_ok = bool(jnp.all(picked[:, 0] == y[1:9:2, 0]))
        except Exception:
            strided_ok = False

    _TPU_FEATURES = (roll_like_jnp, strided_ok)
    return _TPU_FEATURES


# ----------------------------------------------------------------------------
# In-kernel building blocks.  Activations are (Np, 128) f32 values in a
# flattened zero-padded per-image layout; `buf_ref` is VMEM scratch of shape
# (Np + 2G, 128) whose ghost rows stay zero.
# ----------------------------------------------------------------------------

def _interior_mask(geo):
    """Lane-dense (Np,128) bool marking the H x W interior of the padded block."""
    H, W, Wp, Np, _ = geo
    r = lax.broadcasted_iota(jnp.int32, (Np, LANES), 0)
    # y = r // Wp without vector integer division; exact for these tiny ranges.
    y = jnp.floor((r.astype(jnp.float32) + 0.5) * (1.0 / Wp)).astype(jnp.int32)
    x = r - y * Wp
    return (x >= 1) & (x <= W) & (y >= 1) & (y <= H)


def _conv3x3(core, w_ref, buf_ref, geo, cin):
    """3x3 'same' conv; `core` must be zero on non-interior rows and lanes>=cin.
    Taps are lane-packed (pltpu.roll by t*cin) so K = ceil(9/(128//cin))*128."""
    _, _, Wp, Np, G = geo
    buf_ref[G:G + Np, :] = core
    offs = _tap_offsets(Wp)
    tpg = LANES // cin                       # taps packed per 128-lane group
    groups = []
    j = 0
    while j < 9:
        n_t = min(tpg, 9 - j)
        acc = None
        for t in range(n_t):
            win = buf_ref[G + offs[j + t]:G + offs[j + t] + Np, :]
            if t:
                win = pltpu.roll(win, t * cin, axis=1)
            acc = win if acc is None else acc + win   # exact: disjoint lanes
        groups.append(acc.astype(jnp.bfloat16))
        j += n_t
    cols = groups[0] if len(groups) == 1 else jnp.concatenate(groups, axis=-1)
    return jnp.dot(cols, w_ref[...], preferred_element_type=jnp.float32)


def _row(vec_ref, k):
    return vec_ref[k:k + 1, :]


def _resblock(x, mask, w1_ref, w2_ref, vec_ref, row0, buf_ref, geo, depth):
    """FixupResidualModule.forward (border rows of the result are garbage and
    every consumer re-masks or slices the interior)."""
    b1 = _row(vec_ref, row0 + 0)
    b2 = _row(vec_ref, row0 + 1)
    b3 = _row(vec_ref, row0 + 2)
    b4 = _row(vec_ref, row0 + 3)
    sc = _row(vec_ref, row0 + 4)
    r = jnp.maximum(x, 0.0)
    t = _conv3x3(jnp.where(mask, r + b1, 0.0), w1_ref, buf_ref, geo, depth)
    h = jnp.where(mask, jnp.maximum(t + b2, 0.0) + b3, 0.0)
    t = _conv3x3(h, w2_ref, buf_ref, geo, depth)
    return t * sc + b4 + r


def _pool_pick(pm, buf_ref, car_ref, geo, geo_next, strided_ok):
    """MaxPool2d(3, stride=2, padding=1): full-res 3x3 max map + stride-2 pick
    written straight into the next stage's zero-bordered padded layout.
    Pool windows are centred on interior rows only, so the 0.0 ghost margin is
    never read; border rows inside the block hold NEG and are ignored."""
    H, W, Wp, Np, G = geo
    Wp_n = geo_next[2]
    buf_ref[G:G + Np, :] = pm
    offs = _tap_offsets(Wp)
    mm = buf_ref[G + offs[0]:G + offs[0] + Np, :]
    for o in offs[1:]:
        mm = jnp.maximum(mm, buf_ref[G + o:G + o + Np, :])
    buf_ref[G:G + Np, :] = mm
    for oy in range(H // 2):
        src = G + (1 + 2 * oy) * Wp + 1
        dst = (1 + oy) * Wp_n + 1
        if strided_ok:
            car_ref[dst:dst + W // 2, :] = buf_ref[pl.ds(src, W // 2, stride=2), :]
        else:  # fallback: per-row copies (always supported)
            for ox in range(W // 2):
                car_ref[dst + ox:dst + ox + 1, :] = \
                    buf_ref[src + 2 * ox:src + 2 * ox + 1, :]


# ----------------------------------------------------------------------------
# The single fused kernel (one grid step = one image).
# ----------------------------------------------------------------------------

def _fixup_kernel(geoms, chans, strided_ok,
                  x_ref,
                  cw0, w11_0, w12_0, w21_0, w22_0, vec0,
                  cw1, w11_1, w12_1, w21_1, w22_1, vec1,
                  cw2, w11_2, w12_2, w21_2, w22_2, vec2,
                  o_ref,
                  buf_a, buf_b, buf_c, buf_d, car_b, car_c, car_d):
    bufs = [buf_a, buf_b, buf_c, buf_d]
    cars = [None, car_b, car_c, car_d]
    stage_w = [(cw0, w11_0, w12_0, w21_0, w22_0, vec0),
               (cw1, w11_1, w12_1, w21_1, w22_1, vec1),
               (cw2, w11_2, w12_2, w21_2, w22_2, vec2)]

    # Scratch init: only ghost margins of shift buffers must be zero (their
    # interiors are rewritten before every read); carry buffers need a zero
    # border ring and are tiny, so clear them whole.
    for geo, buf in zip(geoms, bufs):
        _, _, _, Np, G = geo
        buf[0:G, :] = jnp.zeros((G, LANES), jnp.float32)
        buf[G + Np:G + Np + G, :] = jnp.zeros((G, LANES), jnp.float32)
    for car in cars[1:]:
        car[...] = jnp.zeros_like(car)

    masks = [_interior_mask(g) for g in geoms]   # hoisted, reused per stage

    act = x_ref[...]                 # stage-1 input: zero border, zero lanes>=C
    for s in range(3):
        cw, w11, w12, w21, w22, vec = stage_w[s]
        cin, depth = chans[s]
        g_conv, g_res = geoms[s], geoms[s + 1]
        m_conv, m_res = masks[s], masks[s + 1]

        # stage head: conv + bias, fused pool + stride-2 pick + re-pad
        core = act if s == 0 else jnp.where(m_conv, act, 0.0)
        co = _conv3x3(core, cw, bufs[s], g_conv, cin) + _row(vec, 0)
        _pool_pick(jnp.where(m_conv, co, NEG), bufs[s], cars[s + 1],
                   g_conv, g_res, strided_ok)

        # two Fixup residual blocks at the pooled resolution
        act = cars[s + 1][...]
        act = _resblock(act, m_res, w11, w12, vec, 1, bufs[s + 1], g_res, depth)
        act = _resblock(act, m_res, w21, w22, vec, 6, bufs[s + 1], g_res, depth)

    o_ref[...] = act                 # final 2x2 padded block, lane-dense


# ----------------------------------------------------------------------------
# Parameter packing (MXU layouts; /255 folded into stage-1 conv weights).
# ----------------------------------------------------------------------------

def _pack_conv_w(w_hwio, scale, roll_like_jnp):
    """(3,3,cin,cout) f32 -> (ngroups*128, 128) bf16 with taps lane-packed to
    match the in-kernel pltpu.roll direction."""
    _, _, cin, cout = w_hwio.shape
    tpg = LANES // cin
    ngroups = -(-9 // tpg)
    w9 = (w_hwio.astype(jnp.float32) * scale).reshape(9, cin, cout)
    wp = jnp.zeros((ngroups, LANES, LANES), jnp.float32)
    for j in range(9):
        g, t = divmod(j, tpg)
        off = (t * cin) if roll_like_jnp else ((-t * cin) % LANES)
        wp = wp.at[g, off:off + cin, :cout].set(w9[j])
    return wp.reshape(ngroups * LANES, LANES).astype(jnp.bfloat16)


def _pack_vec(v):
    return jnp.zeros((LANES,), jnp.float32).at[:v.shape[0]].set(v)


def _pack_stage(s, first_stage, rgb_norm, roll_like_jnp):
    sc0 = (1.0 / 255.0) if (rgb_norm and first_stage) else 1.0
    ws = [_pack_conv_w(s["conv_w"], sc0, roll_like_jnp)]
    rows = [_pack_vec(s["conv_b"])]
    for rk in ("res1", "res2"):
        r = s[rk]
        ws += [_pack_conv_w(r["w1"], 1.0, roll_like_jnp),
               _pack_conv_w(r["w2"], 1.0, roll_like_jnp)]
        rows += [_pack_vec(r["b1"]), _pack_vec(r["b2"]), _pack_vec(r["b3"]),
                 _pack_vec(r["b4"]), _pack_vec(r["scale"])]
    vec = jnp.stack(rows, axis=0)    # (11, 128): conv_b, res1[5], res2[5]
    return ws[0], ws[1], ws[2], ws[3], ws[4], vec


# ----------------------------------------------------------------------------
# Forward wrapper (only input/output format conversion happens outside the
# kernel; everything else is VMEM-resident inside the single pallas_call).
# ----------------------------------------------------------------------------

def fixup_cnn_forward(x_nchw, params, rgb_norm=True):
    """FixupCNN.forward (feature_extractor + NCHW flatten; head unused)."""
    B, C, H, W = x_nchw.shape
    assert H % 8 == 0 and W % 8 == 0, "need three 2x poolings"
    roll_like_jnp, strided_ok = _probe_tpu_features()

    couts = [int(s["conv_b"].shape[0]) for s in params]
    cins = [C] + couts[:-1]
    chans = tuple(zip(cins, couts))
    geoms = [_geom(H, W), _geom(H // 2, W // 2),
             _geom(H // 4, W // 4), _geom(H // 8, W // 8)]

    stage_inputs = [_pack_stage(s, i == 0, rgb_norm, roll_like_jnp)
                    for i, s in enumerate(params)]

    # NCHW -> zero-padded, lane-padded, per-image flattened layout.
    x = jnp.transpose(x_nchw, (0, 2, 3, 1)).astype(jnp.float32)
    xp = jnp.pad(x, ((0, 0), (1, 1), (1, 1), (0, LANES - C)))
    x_flat = xp.reshape(B, geoms[0][3], LANES)

    NpA, NpD = geoms[0][3], geoms[3][3]
    flat_inputs = [x_flat]
    in_specs = [pl.BlockSpec((None, NpA, LANES), lambda b: (b, 0, 0))]
    for st in stage_inputs:
        for arr in st:
            flat_inputs.append(arr)
            in_specs.append(pl.BlockSpec(arr.shape, lambda b: (0, 0)))

    scratch = [pltpu.VMEM((g[3] + 2 * g[4], LANES), jnp.float32) for g in geoms]
    scratch += [pltpu.VMEM((geoms[i][3], LANES), jnp.float32) for i in (1, 2, 3)]

    out = pl.pallas_call(
        partial(_fixup_kernel, geoms, chans, strided_ok),
        out_shape=jax.ShapeDtypeStruct((B, NpD, LANES), jnp.float32),
        grid=(B,),
        in_specs=in_specs,
        out_specs=pl.BlockSpec((None, NpD, LANES), lambda b: (b, 0, 0)),
        scratch_shapes=scratch,
        compiler_params=pltpu.CompilerParams(
            dimension_semantics=("parallel",)),
    )(*flat_inputs)

    Hd, Wd = H // 8, W // 8
    y = out.reshape(B, Hd + 2, Wd + 2, LANES)[:, 1:Hd + 1, 1:Wd + 1, :couts[-1]]
    # PyTorch flattens NCHW -> channel-major ordering.
    return jnp.transpose(y, (0, 3, 1, 2)).reshape(B, -1)


# ----------------------------------------------------------------------------
# Plain-JAX reference with the same arithmetic (bf16 MXU operands, /255 folded
# into stage-1 weights, f32 accumulation/epilogues).
# ----------------------------------------------------------------------------

def _ref_conv(x, w):
    return lax.conv_general_dilated(
        x.astype(jnp.bfloat16), w.astype(jnp.bfloat16),
        window_strides=(1, 1), padding=((1, 1), (1, 1)),
        dimension_numbers=("NHWC", "HWIO", "NHWC"),
        preferred_element_type=jnp.float32)


def _ref_maxpool(x):
    return lax.reduce_window(x, -jnp.inf, lax.max,
                             window_dimensions=(1, 3, 3, 1),
                             window_strides=(1, 2, 2, 1),
                             padding=((0, 0), (1, 1), (1, 1), (0, 0)))


def _ref_resblock(x, p):
    r = jnp.maximum(x, 0.0)
    out = _ref_conv(r + p["b1"], p["w1"]) + p["b2"]
    out = jnp.maximum(out, 0.0) + p["b3"]
    out = _ref_conv(out, p["w2"]) * p["scale"] + p["b4"]
    return out + r


def fixup_cnn_reference(x_nchw, params, rgb_norm=True):
    x = jnp.transpose(x_nchw, (0, 2, 3, 1)).astype(jnp.float32)
    for i, s in enumerate(params):
        w = s["conv_w"] * ((1.0 / 255.0) if (rgb_norm and i == 0) else 1.0)
        x = _ref_conv(x, w) + s["conv_b"]
        x = _ref_maxpool(x)
        x = _ref_resblock(x, s["res1"])
        x = _ref_resblock(x, s["res2"])
    B = x.shape[0]
    return jnp.transpose(x, (0, 3, 1, 2)).reshape(B, -1)


# ----------------------------------------------------------------------------
# Deterministic parameter construction (shapes follow the PyTorch __init__).
# ----------------------------------------------------------------------------

def _conv_init(key, cin, cout):
    bound = 1.0 / math.sqrt(cin * 9)          # PyTorch default Conv2d init
    return jax.random.uniform(key, (3, 3, cin, cout), jnp.float32, -bound, bound)


def _residual_params(key, depth, num_residual=6):
    ks = jax.random.split(key, 7)
    w1 = _conv_init(ks[0], depth, depth) * (1.0 / math.sqrt(num_residual))
    # NOTE: Fixup zero-inits conv2 and the bias/scale params; small random
    # values are used instead so every fused epilogue is numerically exercised
    # (forward-pass semantics are unchanged).
    w2 = _conv_init(ks[1], depth, depth) * 0.1
    b = [0.1 * jax.random.normal(k, (depth,), jnp.float32) for k in ks[2:6]]
    scale = 1.0 + 0.1 * jax.random.normal(ks[6], (depth,), jnp.float32)
    return dict(w1=w1, w2=w2, b1=b[0], b2=b[1], b3=b[2], b4=b[3], scale=scale)


def init_params(key, depth_in):
    params, cin = [], depth_in
    for cout in (16, 32, 32):
        key, k1, k2, k3, k4 = jax.random.split(key, 5)
        bound = 1.0 / math.sqrt(cin * 9)
        params.append(dict(
            conv_w=_conv_init(k1, cin, cout),
            conv_b=jax.random.uniform(k4, (cout,), jnp.float32, -bound, bound),
            res1=_residual_params(k2, cout),
            res2=_residual_params(k3, cout)))
        cin = cout
    return params


# ----------------------------------------------------------------------------

if __name__ == "__main__":
    key = jax.random.PRNGKey(0)
    B, C, H, W = 2, 4, 16, 16                 # input_space = (4, 16, 16)
    key, kx = jax.random.split(key)
    x = jax.random.uniform(kx, (B, C, H, W), jnp.float32, 0.0, 255.0)   # NCHW
    params = init_params(key, C)

    _probe_tpu_features()                     # prime probes eagerly, pre-jit

    fwd = jax.jit(lambda xx, pp: fixup_cnn_forward(xx, pp, rgb_norm=True))
    out = jax.block_until_ready(fwd(x, params))

    # 16x16 -> 8 -> 4 -> 2 spatial; final depth 32 -> 32*2*2 = 128 features
    assert out.shape == (B, 32 * (H // 8) * (W // 8)), out.shape
    assert bool(jnp.all(jnp.isfinite(out)))

    ref_fn = jax.jit(lambda xx, pp: fixup_cnn_reference(xx, pp, rgb_norm=True))
    ref = jax.block_until_ready(ref_fn(x, params))
    err = float(jnp.max(jnp.abs(out - ref)))
    assert err < 2e-2, f"max |pallas - reference| = {err}"
    print("KERNEL_OK")
</pallas_src>

<mosaic_0001>
module attributes {stable_mosaic.version = 11 : i64} {
  func.func @roll_probe(%arg0: memref<8x128xf32, #tpu.memory_space<vmem>>, %arg1: memref<8x128xf32, #tpu.memory_space<vmem>>) attributes {dimension_semantics = [], scalar_prefetch = 0 : i64, scratch_operands = 0 : i64, tpu.core_type = #tpu.core_type<tc>} {
    %c0 = arith.constant 0 : index
    %c0_0 = arith.constant 0 : index
    %0 = vector.load %arg0[%c0, %c0_0] : memref<8x128xf32, #tpu.memory_space<vmem>>, vector<8x128xf32>
    %c1_i32 = arith.constant 1 : i32
    %1 = tpu.dynamic_rotate %0 by %c1_i32 dim 1 : vector<8x128xf32>, i32 -> vector<8x128xf32>
    %c0_1 = arith.constant 0 : index
    %c0_2 = arith.constant 0 : index
    %2 = vector.load %arg1[%c0_1, %c0_2] : memref<8x128xf32, #tpu.memory_space<vmem>>, vector<8x128xf32>
    tpu.vector_store %arg1[%c0_1, %c0_2], %1 {strides = array<i32>} : memref<8x128xf32, #tpu.memory_space<vmem>>, vector<8x128xf32>,
    return
  }
}

</mosaic_0001>

<llo_original>
// kernel: tpu_custom_call.1
$region0: #{tpu_custom_call.1}
  #allocation0 [shape = 'u32[]', space=smem, size = 0x4, offset = 0x4, fixed_abs, tag = 'smem constant byte address 0x4 - core index']
  #allocation1 [shape = 'u32[144,128]{1,0:T(1,128)}', space=vmem, size = 0x12000, scoped, tag = 'internal scratch']
  %s0 = inlined_call_operand.hbm [shape: f32[8,128], index: 0, kind: input, shape index: {}]
  %s1 = inlined_call_operand.hbm [shape: f32[8,128], index: 1, kind: output, shape index: {}]
  %s2 = sld [smem:[#allocation0]]
  $region18: #{tpu_custom_call.1} parent=0
    _
  %s4 = ssub.s32 1, %s2
  %s5 = scalar_select 0, %s4, %s2
  $region1: #{tpu_custom_call.1} parent=0
    #allocation2 [shape = 'u8[4096]{0}', space=vmem, size = 0x1000, scoped, tag = 'input window, operand 0, single buffered']
    #allocation3 [shape = 's32[1]{0}', space=sflag, size = 0x4, scoped, tag = 'scoped memory for tpu_custom_call.1']
    #allocation4 [shape = 's32[1]{0}', space=sflag, size = 0x4, scoped, tag = 'scoped memory for tpu_custom_call.1']
    #allocation5 [shape = 'u8[4096]{0}', space=vmem, size = 0x1000, scoped, tag = 'output window, operand 0, single buffered']
    %6 = vsyncpa [#allocation3], 0
    %7 = vsyncpa [#allocation4], 0
    // Predicated region
    $region2: #{tpu_custom_call.1} parent=1 // pred_check
      _
    $region3: #{tpu_custom_call.1} parent=1 // pred_check_branch
      %9 = sbr.rel (0) target = $region5
    $region4: #{tpu_custom_call.1} parent=1 // pred_region
      %s11 = ssub.s32 128, 128
      %12 = vsyncadd [#allocation3], %s11
      %s14 = sshll.u32 [#allocation2], 4
      %s15 = int_to_ptr.vmem [resolvable:$true] %s14
      %17 = dma.hbm_to_vmem [thread:$0]  %s0, 128, %s15, [#allocation3]
    $region5: #{tpu_custom_call.1} parent=1 // pred_fallthru
      _
    // Predicated region
    $region6: #{tpu_custom_call.1} parent=1 // pred_check
      _
    $region7: #{tpu_custom_call.1} parent=1 // pred_check_branch
      %19 = sbr.rel (0) target = $region9
    $region8: #{tpu_custom_call.1} parent=1 // pred_region
      %20 = dma.done [#allocation3], 128
    $region9: #{tpu_custom_call.1} parent=1 // pred_fallthru
      _
    %v21 = vld [vmem:[#allocation2] sm:$0xff]
    %22 = vrot.lane.b32.xlu0 %v21, 1
    %v23 = vpop.permute.xlu0 %22
    %24 = vst [vmem:[#allocation5] sm:$0xff] %v23
    // Predicated region
    $region10: #{tpu_custom_call.1} parent=1 // pred_check
      _
    $region11: #{tpu_custom_call.1} parent=1 // pred_check_branch
      %26 = sbr.rel (0) target = $region13
    $region12: #{tpu_custom_call.1} parent=1 // pred_region
      %s28 = ssub.s32 128, 128
      %29 = vsyncadd [#allocation4], %s28
      %s31 = sshll.u32 [#allocation5], 4
      %s32 = int_to_ptr.vmem [resolvable:$true] %s31
      %34 = dma.vmem_to_hbm [thread:$0]  %s32, 128, %s1, [#allocation4]
    $region13: #{tpu_custom_call.1} parent=1 // pred_fallthru
      _
    // Predicated region
    $region14: #{tpu_custom_call.1} parent=1 // pred_check
      _
    $region15: #{tpu_custom_call.1} parent=1 // pred_check_branch
      %36 = sbr.rel (0) target = $region17
    $region16: #{tpu_custom_call.1} parent=1 // pred_region
      %37 = dma.done [#allocation4], 128
    $region17: #{tpu_custom_call.1} parent=1 // pred_fallthru
      _
    %38 = vsyncpa [#allocation3], 1
    %39 = vsyncpa [#allocation4], 1

</llo_original>
